<compile_context>
chip_gen: v5e
topology: v5e:2x2
jax: 0.10.0
libtpu: 0.0.40
codegen_flags: <defaults>
</compile_context>

<pallas_src>
import functools

import jax
import jax.numpy as jnp
from jax.experimental import pallas as pl
from jax.experimental.pallas import tpu as pltpu


def _head_kernel(x_ref, w1_ref, w2_ref, b_ref, out_ref, acc_ref, *, inv_s, n_classes):
    # x_ref:  (TB, TS, C) bf16  channels-last stage-4 feature tile
    # w1_ref: (C, H1)     bf16  fc weight (transposed vs torch), grid-invariant
    # w2_ref: (H1, H1)    bf16  out weight, zero-padded cols >= n_classes, grid-invariant
    # b_ref:  (16, H1)    f32   row 0 = fc bias, row 8 = out bias (zero-padded)
    # out_ref:(TB, NC)    f32   classification logits (written on last S step only)
    # acc_ref:(TB, H1)    f32   running sum_over_S of fc(x) per batch row
    s_idx = pl.program_id(1)

    @pl.when(s_idx == 0)
    def _():
        acc_ref[...] = jnp.zeros_like(acc_ref)

    TB, TS, C = x_ref.shape
    H1 = w1_ref.shape[1]

    # fc before pooling (mean and Linear commute): one bf16 MXU matmul, f32 accumulation.
    # The (TB, TS, C) -> (TB*TS, C) collapse is metadata-only (TS multiple of 8 or = S,
    # C = 768 stays on the lane axis).
    x2d = x_ref[...].reshape(TB * TS, C)
    y = jnp.dot(x2d, w1_ref[...], preferred_element_type=jnp.float32)   # (TB*TS, H1)

    # Per-batch partial sum of the fc outputs: simple VPU/XLU accumulate, no pool matrix.
    acc_ref[...] += y.reshape(TB, TS, H1).sum(axis=1)

    @pl.when(s_idx == pl.num_programs(1) - 1)
    def _():
        # Global average pool (scale by 1/S) + fc bias + SiLU, all f32 on tiny tensors.
        h = acc_ref[...] * inv_s + b_ref[0:1, :]
        h = h * jax.nn.sigmoid(h)
        # Output layer: bf16 x bf16 MXU dot (single pass), f32 accumulation; padded
        # columns of w2 are zero so slicing after the dot is exact.
        logits = jnp.dot(h.astype(w2_ref.dtype), w2_ref[...],
                         preferred_element_type=jnp.float32) + b_ref[8:9, :]
        out_ref[...] = logits[:, :n_classes].astype(out_ref.dtype)


def pack_out_weight(w2, hidden):
    """Zero-pad the (H1, n_classes) out weight to a sublane/lane-friendly (H1, H1) bf16."""
    h1, nc = w2.shape
    assert h1 == hidden and nc <= hidden
    w2p = jnp.zeros((hidden, hidden), jnp.bfloat16)
    return w2p.at[:, :nc].set(w2.astype(jnp.bfloat16))


def pack_biases(b1, b2, hidden):
    """Pack fc/out biases into a (16, H1) f32 buffer with both rows sublane-aligned.

    Row 0 = fc bias (H1,), row 8 = out bias zero-padded to H1; other rows zero."""
    nc = b2.shape[0]
    b = jnp.zeros((16, hidden), jnp.float32)
    b = b.at[0, :].set(b1.astype(jnp.float32))
    b = b.at[8, :nc].set(b2.astype(jnp.float32))
    return b


def _pick_tiles(batch, s, channels, itemsize, max_tile_bytes=4 << 20):
    """Choose (TB, TS): TB shards the batch ("parallel"), TS tiles the S reduction."""
    tb = 8 if batch % 8 == 0 else batch
    max_rows = max(8, max_tile_bytes // (channels * itemsize))
    if s % 8 != 0:
        ts = s                      # must equal the full dim if not 8-divisible
    else:
        ts = 8
        cand = 16
        while cand <= s:
            if s % cand == 0 and tb * cand <= max_rows:
                ts = cand
            cand += 8
    return tb, ts


def swin_vit_mlp_head(feat_ndhwc, w1, w2_packed, biases, n_classes):
    """Fused head: global 3-D average pool + Linear(768,32) + SiLU + Linear(32, n_classes).

    feat_ndhwc: (B, D, H, W, C) channels-last stage-4 backbone feature (bf16 preferred).
    w1:         (C, H1) fc weight, stored transposed vs torch (bf16 preferred).
    w2_packed:  output of pack_out_weight (bf16, (H1, H1)).
    biases:     output of pack_biases (f32, (16, H1)).
    """
    B, D, H, W, C = feat_ndhwc.shape
    S = D * H * W
    H1 = w1.shape[1]

    # Metadata-only flatten: channels stay on the lane axis, no transpose/cast round-trip.
    x3d = feat_ndhwc.reshape(B, S, C)
    itemsize = jnp.dtype(feat_ndhwc.dtype).itemsize

    TB, TS = _pick_tiles(B, S, C, itemsize)
    grid = (B // TB, S // TS)

    # Explicit VMEM budget: 2 double-buffered feature tiles + small weights/scratch +
    # headroom.  Safe on v5e (16 MiB scoped default) and v7x (64 MiB physical).
    tile_bytes = TB * TS * C * itemsize
    fixed_bytes = 2 * (C * H1 * 2 + H1 * H1 * 2 + 16 * 128 * 4) + TB * H1 * 4 + 2 * TB * 128 * 4
    vmem_limit = int(min(100 << 20, max(2 * tile_bytes + fixed_bytes + (4 << 20), 16 << 20)))

    cost = pl.CostEstimate(
        flops=2 * B * S * C * H1 + 2 * B * H1 * H1,
        transcendentals=B * H1,
        bytes_accessed=B * S * C * itemsize + C * H1 * 2 + H1 * H1 * 2
                       + 16 * H1 * 4 + B * n_classes * 4,
    )

    grid_spec = pltpu.PrefetchScalarGridSpec(
        num_scalar_prefetch=0,
        grid=grid,
        in_specs=[
            pl.BlockSpec((TB, TS, C), lambda b, s: (b, s, 0)),
            pl.BlockSpec((C, H1), lambda b, s: (0, 0)),
            pl.BlockSpec((H1, H1), lambda b, s: (0, 0)),
            pl.BlockSpec((16, H1), lambda b, s: (0, 0)),
        ],
        out_specs=pl.BlockSpec((TB, n_classes), lambda b, s: (b, 0)),
        scratch_shapes=[pltpu.VMEM((TB, H1), jnp.float32)],
    )

    kernel = functools.partial(_head_kernel, inv_s=1.0 / S, n_classes=n_classes)

    return pl.pallas_call(
        kernel,
        out_shape=jax.ShapeDtypeStruct((B, n_classes), jnp.float32),
        grid_spec=grid_spec,
        compiler_params=pltpu.CompilerParams(
            # Batch tiles shard across TensorCores (v7x megacore); S is the reduction.
            dimension_semantics=("parallel", "arbitrary"),
            vmem_limit_bytes=vmem_limit,
            # Allow XLA to fuse only the upstream layout/cast on the big feature operand
            # into the pallas operand DMA instead of materializing it in HBM.
            allow_input_fusion=[True, False, False, False],
        ),
        cost_estimate=cost,
    )(x3d, w1, w2_packed, biases)


def _reference(feat_ndhwc, w1, b1, w2, b2):
    """Pure-JAX reference mirroring the PyTorch forward (pool -> fc -> SiLU -> out)."""
    B, C = feat_ndhwc.shape[0], feat_ndhwc.shape[-1]
    x = feat_ndhwc.astype(jnp.float32).reshape(B, -1, C)
    pooled = jnp.mean(x, axis=1)
    h = pooled @ w1.astype(jnp.float32) + b1.astype(jnp.float32)
    h = h * jax.nn.sigmoid(h)
    return h @ w2.astype(jnp.float32) + b2.astype(jnp.float32)


if __name__ == "__main__":
    # Module hyper-params (small, consistent with SwinViTmlp):
    n_classes = 2
    feature_size = 48
    C = 16 * feature_size          # 768 channels at stage-4 (fixed by fc = Linear(768, 32))
    B = 2
    D = Hs = Ws = 2                # img_size = (64, 64, 64) -> 64/32 = 2 per spatial dim
    H1 = 32                        # fc hidden size

    key = jax.random.PRNGKey(0)
    k_feat, k_w1, k_b1, k_w2, k_b2 = jax.random.split(key, 5)

    # Deterministic synthetic stage-4 feature (stands in for backbone(x)[4]), emitted
    # channels-last and in bf16, as a real bf16 backbone would.
    feat = jax.random.normal(
        k_feat, (B, D, Hs, Ws, C), dtype=jnp.float32).astype(jnp.bfloat16)

    # PyTorch-style uniform(-1/sqrt(fan_in), 1/sqrt(fan_in)) Linear params, stored
    # transposed as (in, out). Big fc weight in bf16; tiny params created in f32.
    s1 = 1.0 / jnp.sqrt(jnp.float32(C))
    w1 = jax.random.uniform(k_w1, (C, H1), jnp.float32, -s1, s1).astype(jnp.bfloat16)
    b1 = jax.random.uniform(k_b1, (H1,), jnp.float32, -s1, s1)
    s2 = 1.0 / jnp.sqrt(jnp.float32(H1))
    w2 = jax.random.uniform(k_w2, (H1, n_classes), jnp.float32, -s2, s2)
    b2 = jax.random.uniform(k_b2, (n_classes,), jnp.float32, -s2, s2)

    # One-time packing, outside the hot path (sublane-aligned layouts).
    w2_packed = pack_out_weight(w2, H1)
    biases = pack_biases(b1, b2, H1)

    out = swin_vit_mlp_head(feat, w1, w2_packed, biases, n_classes)
    out = jax.block_until_ready(out)

    ref = _reference(feat, w1, b1, w2, b2)
    assert out.shape == (B, n_classes)
    # bf16 feature / weight operands + fc-before-pool reassociation -> loosened tolerance
    # vs the f32 pool-before-fc reference (exactly equal only in exact arithmetic).
    assert jnp.allclose(out, ref, atol=1e-2, rtol=1e-2), (out, ref)

    print("KERNEL_OK")
</pallas_src>

<mosaic_0001>
module attributes {stable_mosaic.version = 11 : i64} {
  func.func @_head_kernel(%arg0: i32, %arg1: i32, %arg2: memref<2x8x768xbf16, #tpu.memory_space<vmem>>, %arg3: memref<768x32xbf16, #tpu.memory_space<vmem>>, %arg4: memref<32x32xbf16, #tpu.memory_space<vmem>>, %arg5: memref<16x32xf32, #tpu.memory_space<vmem>>, %arg6: memref<2x2xf32, #tpu.memory_space<vmem>>, %arg7: memref<2x32xf32, #tpu.memory_space<vmem>>) attributes {dimension_semantics = [#tpu.dimension_semantics<parallel>, #tpu.dimension_semantics<arbitrary>], iteration_bounds = array<i64: 1, 1>, scalar_prefetch = 0 : i64, scratch_operands = 1 : i64, tpu.core_type = #tpu.core_type<tc>, window_params = [{transform_indices = @transform_0, window_bounds = array<i64: 2, 8, 768>}, {pipeline_mode = #tpu.pipeline_mode<synchronous>, transform_indices = @transform_1, window_bounds = array<i64: 768, 32>}, {pipeline_mode = #tpu.pipeline_mode<synchronous>, transform_indices = @transform_2, window_bounds = array<i64: 32, 32>}, {pipeline_mode = #tpu.pipeline_mode<synchronous>, transform_indices = @transform_3, window_bounds = array<i64: 16, 32>}, {transform_indices = @transform_4, window_bounds = array<i64: 2, 2>}]} {
    %c0_i32 = arith.constant 0 : i32
    %0 = arith.cmpi eq, %arg1, %c0_i32 : i32
    %1 = arith.extui %0 : i1 to i32
    %c0_i32_0 = arith.constant 0 : i32
    %2 = arith.cmpi ne, %1, %c0_i32_0 : i32
    scf.if %2 {
      %cst_12 = arith.constant 0.000000e+00 : f32
      %15 = vector.broadcast %cst_12 : f32 to vector<2x32xf32>
      %c0_13 = arith.constant 0 : index
      %c0_14 = arith.constant 0 : index
      %16 = vector.load %arg7[%c0_13, %c0_14] : memref<2x32xf32, #tpu.memory_space<vmem>>, vector<2x32xf32>
      tpu.vector_store %arg7[%c0_13, %c0_14], %15 {strides = array<i32>} : memref<2x32xf32, #tpu.memory_space<vmem>>, vector<2x32xf32>,
    } else {
    }
    %c0 = arith.constant 0 : index
    %c0_1 = arith.constant 0 : index
    %c0_2 = arith.constant 0 : index
    %3 = vector.load %arg2[%c0, %c0_1, %c0_2] : memref<2x8x768xbf16, #tpu.memory_space<vmem>>, vector<2x8x768xbf16>
    %4 = vector.shape_cast %3 : vector<2x8x768xbf16> to vector<16x768xbf16>
    %c0_3 = arith.constant 0 : index
    %c0_4 = arith.constant 0 : index
    %5 = vector.load %arg3[%c0_3, %c0_4] : memref<768x32xbf16, #tpu.memory_space<vmem>>, vector<768x32xbf16>
    %cst = arith.constant dense<0.000000e+00> : vector<16x32xf32>
    %6 = tpu.matmul %4, %5, %cst {dimension_numbers = #tpu.dot_dimension_numbers<[1], [0], [0], [1], [0, 0, 1, 1], [], []>} : vector<16x768xbf16>, vector<768x32xbf16>, vector<16x32xf32> -> vector<16x32xf32>
    %c0_5 = arith.constant 0 : index
    %c0_6 = arith.constant 0 : index
    %7 = vector.load %arg7[%c0_5, %c0_6] : memref<2x32xf32, #tpu.memory_space<vmem>>, vector<2x32xf32>
    %8 = vector.shape_cast %6 : vector<16x32xf32> to vector<2x8x32xf32>
    %cst_7 = arith.constant dense<0.000000e+00> : vector<2x32xf32>
    %9 = vector.multi_reduction <add>, %8, %cst_7 [1] : vector<2x8x32xf32> to vector<2x32xf32>
    %10 = arith.addf %7, %9 : vector<2x32xf32>
    %c0_8 = arith.constant 0 : index
    %c0_9 = arith.constant 0 : index
    %11 = vector.load %arg7[%c0_8, %c0_9] : memref<2x32xf32, #tpu.memory_space<vmem>>, vector<2x32xf32>
    tpu.vector_store %arg7[%c0_8, %c0_9], %10 {strides = array<i32>} : memref<2x32xf32, #tpu.memory_space<vmem>>, vector<2x32xf32>,
    %c0_i32_10 = arith.constant 0 : i32
    %12 = arith.cmpi eq, %arg1, %c0_i32_10 : i32
    %13 = arith.extui %12 : i1 to i32
    %c0_i32_11 = arith.constant 0 : i32
    %14 = arith.cmpi ne, %13, %c0_i32_11 : i32
    scf.if %14 {
      %c0_12 = arith.constant 0 : index
      %c0_13 = arith.constant 0 : index
      %15 = vector.load %arg7[%c0_12, %c0_13] : memref<2x32xf32, #tpu.memory_space<vmem>>, vector<2x32xf32>
      %cst_14 = arith.constant 1.250000e-01 : f32
      %16 = vector.broadcast %cst_14 : f32 to vector<2x32xf32>
      %17 = arith.mulf %15, %16 : vector<2x32xf32>
      %c0_15 = arith.constant 0 : index
      %c0_16 = arith.constant 0 : index
      %18 = vector.load %arg5[%c0_15, %c0_16] : memref<16x32xf32, #tpu.memory_space<vmem>>, vector<1x32xf32>
      %19 = vector.broadcast %18 : vector<1x32xf32> to vector<2x32xf32>
      %20 = arith.addf %17, %19 : vector<2x32xf32>
      %21 = arith.negf %20 : vector<2x32xf32>
      %22 = math.exp %21 : vector<2x32xf32>
      %cst_17 = arith.constant 1.000000e+00 : f32
      %23 = vector.broadcast %cst_17 : f32 to vector<2x32xf32>
      %24 = arith.addf %23, %22 : vector<2x32xf32>
      %25 = arith.divf %23, %24 : vector<2x32xf32>
      %26 = arith.mulf %20, %25 : vector<2x32xf32>
      %27 = arith.truncf %26 : vector<2x32xf32> to vector<2x32xbf16>
      %c0_18 = arith.constant 0 : index
      %c0_19 = arith.constant 0 : index
      %28 = vector.load %arg4[%c0_18, %c0_19] : memref<32x32xbf16, #tpu.memory_space<vmem>>, vector<32x32xbf16>
      %cst_20 = arith.constant dense<0.000000e+00> : vector<2x32xf32>
      %29 = tpu.matmul %27, %28, %cst_20 {dimension_numbers = #tpu.dot_dimension_numbers<[1], [0], [0], [1], [0, 0, 1, 1], [], []>} : vector<2x32xbf16>, vector<32x32xbf16>, vector<2x32xf32> -> vector<2x32xf32>
      %c8 = arith.constant 8 : index
      %c0_21 = arith.constant 0 : index
      %30 = vector.load %arg5[%c8, %c0_21] : memref<16x32xf32, #tpu.memory_space<vmem>>, vector<1x32xf32>
      %31 = vector.broadcast %30 : vector<1x32xf32> to vector<2x32xf32>
      %32 = arith.addf %29, %31 : vector<2x32xf32>
      %33 = vector.extract_strided_slice %32 {offsets = [0, 0], sizes = [2, 2], strides = [1, 1]} : vector<2x32xf32> to vector<2x2xf32>
      %c0_22 = arith.constant 0 : index
      %c0_23 = arith.constant 0 : index
      %34 = vector.load %arg6[%c0_22, %c0_23] : memref<2x2xf32, #tpu.memory_space<vmem>>, vector<2x2xf32>
      tpu.vector_store %arg6[%c0_22, %c0_23], %33 {strides = array<i32>} : memref<2x2xf32, #tpu.memory_space<vmem>>, vector<2x2xf32>,
    } else {
    }
    return
  }
  func.func @transform_0(%arg0: i32, %arg1: i32) -> (i32, i32, i32) {
    %c0_i32 = arith.constant 0 : i32
    %c0_i32_0 = arith.constant 0 : i32
    return %arg0, %arg1, %c0_i32 : i32, i32, i32
  }
  func.func @transform_1(%arg0: i32, %arg1: i32) -> (i32, i32) {
    %c0_i32 = arith.constant 0 : i32
    %c0_i32_0 = arith.constant 0 : i32
    %c0_i32_1 = arith.constant 0 : i32
    return %c0_i32, %c0_i32_0 : i32, i32
  }
  func.func @transform_2(%arg0: i32, %arg1: i32) -> (i32, i32) {
    %c0_i32 = arith.constant 0 : i32
    %c0_i32_0 = arith.constant 0 : i32
    %c0_i32_1 = arith.constant 0 : i32
    return %c0_i32, %c0_i32_0 : i32, i32
  }
  func.func @transform_3(%arg0: i32, %arg1: i32) -> (i32, i32) {
    %c0_i32 = arith.constant 0 : i32
    %c0_i32_0 = arith.constant 0 : i32
    %c0_i32_1 = arith.constant 0 : i32
    return %c0_i32, %c0_i32_0 : i32, i32
  }
  func.func @transform_4(%arg0: i32, %arg1: i32) -> (i32, i32) {
    %c0_i32 = arith.constant 0 : i32
    %c0_i32_0 = arith.constant 0 : i32
    return %arg0, %c0_i32 : i32, i32
  }
}

</mosaic_0001>

<llo_original>
// kernel: tpu_custom_call.1
$region0: #{tpu_custom_call.1}
  #allocation0 [shape = 'u32[]', space=smem, size = 0x4, offset = 0x4, fixed_abs, tag = 'smem constant byte address 0x4 - core index']
  #allocation1 [shape = 'u32[72,128]{1,0:T(1,128)}', space=vmem, size = 0x9000, scoped, tag = 'internal scratch']
  #allocation2 [shape = 'f32[2,32]{1,0:T(2,128)}', space=vmem, size = 0x400, scoped, tag = 'scratch operand']
  %s0 = inlined_call_operand.vmem [shape: bf16[2,8,768], index: 0, kind: input, shape index: {}]
  %s1 = inlined_call_operand.vmem [shape: bf16[768,32], index: 1, kind: input, shape index: {}]
  %s2 = inlined_call_operand.vmem [shape: bf16[32,32], index: 2, kind: input, shape index: {}]
  %s3 = inlined_call_operand.vmem [shape: f32[16,32], index: 3, kind: input, shape index: {}]
  %s4 = inlined_call_operand.hbm [shape: f32[2,2], index: 4, kind: output, shape index: {}]
  %s5 = sld [smem:[#allocation0]]
  $region34: #{tpu_custom_call.1} parent=0
    _
  %s7 = ssub.s32 1, %s5
  %s8 = scalar_select 0, %s7, %s5
  $region1: #{tpu_custom_call.1} parent=0
    #allocation3 [shape = 'u8[1024]{0}', space=vmem, size = 0x400, scoped, tag = 'output window, operand 0, single buffered']
    #allocation4 [shape = 's32[1]{0}', space=sflag, size = 0x4, scoped, tag = 'scoped memory for tpu_custom_call.1']
    %9 = vsyncpa [#allocation4], 0
    // Predicated region
    $region2: #{tpu_custom_call.1} parent=1 // pred_check
      _
    $region3: #{tpu_custom_call.1} parent=1 // pred_check_branch
      %11 = sbr.rel (0) target = $region5
    $region4: #{tpu_custom_call.1} parent=1 // pred_region
      _
    $region5: #{tpu_custom_call.1} parent=1 // pred_fallthru
      _
    // Predicated region
    $region6: #{tpu_custom_call.1} parent=1 // pred_check
      _
    $region7: #{tpu_custom_call.1} parent=1 // pred_check_branch
      %13 = sbr.rel (0) target = $region9
    $region8: #{tpu_custom_call.1} parent=1 // pred_region
      _
    $region9: #{tpu_custom_call.1} parent=1 // pred_fallthru
      _
    // Predicated region
    $region10: #{tpu_custom_call.1} parent=1 // pred_check
      _
    $region11: #{tpu_custom_call.1} parent=1 // pred_check_branch
      %15 = sbr.rel (0) target = $region13
    $region12: #{tpu_custom_call.1} parent=1 // pred_region
      _
    $region13: #{tpu_custom_call.1} parent=1 // pred_fallthru
      _
    // Predicated region
    $region14: #{tpu_custom_call.1} parent=1 // pred_check
      _
    $region15: #{tpu_custom_call.1} parent=1 // pred_check_branch
      %17 = sbr.rel (0) target = $region17
    $region16: #{tpu_custom_call.1} parent=1 // pred_region
      _
    $region17: #{tpu_custom_call.1} parent=1 // pred_fallthru
      _
    %p19 = scmp.eq.s32.totalorder 0, 0
    // Predicated region
    $region18: #{tpu_custom_call.1} parent=1 // pred_check
      %p20 = pneg %p19
    $region19: #{tpu_custom_call.1} parent=1 // pred_check_branch
      %22 = sbr.rel (%p20) target = $region21
    $region20: #{tpu_custom_call.1} parent=1 // pred_region
      %vm23 = vcmask 254976
      %24 = vst.msk [vmem:[#allocation2] sm:$0x3] %vm23, 0.0
    $region21: #{tpu_custom_call.1} parent=1 // pred_fallthru
      _
    %v25 = vld [vmem:[%s0] sm:$0xff]
    %v26 = vld [vmem:[%s0 + $0x8] sm:$0xff]
    %v27 = vld [vmem:[%s0 + $0x10] sm:$0xff]
    %v28 = vld [vmem:[%s0 + $0x18] sm:$0xff]
    %v29 = vld [vmem:[%s0 + $0x20] sm:$0xff]
    %v30 = vld [vmem:[%s0 + $0x28] sm:$0xff]
    %v31 = vld [vmem:[%s1] sm:$0xf]
    %v32 = vld [vmem:[%s1 + $0x4] sm:$0xf]
    %v33 = vld [vmem:[%s1 + $0x8] sm:$0xf]
    %v34 = vld [vmem:[%s1 + $0xc] sm:$0xf]
    %v35 = vld [vmem:[%s1 + $0x10] sm:$0xf]
    %v36 = vld [vmem:[%s1 + $0x14] sm:$0xf]
    %v37 = vld [vmem:[%s1 + $0x18] sm:$0xf]
    %v38 = vld [vmem:[%s1 + $0x1c] sm:$0xf]
    %v39 = vld [vmem:[%s1 + $0x20] sm:$0xf]
    %v40 = vld [vmem:[%s1 + $0x24] sm:$0xf]
    %v41 = vld [vmem:[%s1 + $0x28] sm:$0xf]
    %v42 = vld [vmem:[%s1 + $0x2c] sm:$0xf]
    %v43 = vld [vmem:[%s1 + $0x30] sm:$0xf]
    %v44 = vld [vmem:[%s1 + $0x34] sm:$0xf]
    %v45 = vld [vmem:[%s1 + $0x38] sm:$0xf]
    %v46 = vld [vmem:[%s1 + $0x3c] sm:$0xf]
    %v47 = vld [vmem:[%s1 + $0x40] sm:$0xf]
    %v48 = vld [vmem:[%s1 + $0x44] sm:$0xf]
    %v49 = vld [vmem:[%s1 + $0x48] sm:$0xf]
    %v50 = vld [vmem:[%s1 + $0x4c] sm:$0xf]
    %v51 = vld [vmem:[%s1 + $0x50] sm:$0xf]
    %v52 = vld [vmem:[%s1 + $0x54] sm:$0xf]
    %v53 = vld [vmem:[%s1 + $0x58] sm:$0xf]
    %v54 = vld [vmem:[%s1 + $0x5c] sm:$0xf]
    %v55 = vld [vmem:[%s1 + $0x60] sm:$0xf]
    %v56 = vld [vmem:[%s1 + $0x64] sm:$0xf]
    %v57 = vld [vmem:[%s1 + $0x68] sm:$0xf]
    %v58 = vld [vmem:[%s1 + $0x6c] sm:$0xf]
    %v59 = vld [vmem:[%s1 + $0x70] sm:$0xf]
    %v60 = vld [vmem:[%s1 + $0x74] sm:$0xf]
    %v61 = vld [vmem:[%s1 + $0x78] sm:$0xf]
    %v62 = vld [vmem:[%s1 + $0x7c] sm:$0xf]
    %v63 = vld [vmem:[%s1 + $0x80] sm:$0xf]
    %v64 = vld [vmem:[%s1 + $0x84] sm:$0xf]
    %v65 = vld [vmem:[%s1 + $0x88] sm:$0xf]
    %v66 = vld [vmem:[%s1 + $0x8c] sm:$0xf]
    %v67 = vld [vmem:[%s1 + $0x90] sm:$0xf]
    %v68 = vld [vmem:[%s1 + $0x94] sm:$0xf]
    %v69 = vld [vmem:[%s1 + $0x98] sm:$0xf]
    %v70 = vld [vmem:[%s1 + $0x9c] sm:$0xf]
    %v71 = vld [vmem:[%s1 + $0xa0] sm:$0xf]
    %v72 = vld [vmem:[%s1 + $0xa4] sm:$0xf]
    %v73 = vld [vmem:[%s1 + $0xa8] sm:$0xf]
    %v74 = vld [vmem:[%s1 + $0xac] sm:$0xf]
    %v75 = vld [vmem:[%s1 + $0xb0] sm:$0xf]
    %v76 = vld [vmem:[%s1 + $0xb4] sm:$0xf]
    %v77 = vld [vmem:[%s1 + $0xb8] sm:$0xf]
    %v78 = vld [vmem:[%s1 + $0xbc] sm:$0xf]
    %v79 = vld [vmem:[%s1 + $0xc0] sm:$0xf]
    %v80 = vld [vmem:[%s1 + $0xc4] sm:$0xf]
    %v81 = vld [vmem:[%s1 + $0xc8] sm:$0xf]
    %v82 = vld [vmem:[%s1 + $0xcc] sm:$0xf]
    %v83 = vld [vmem:[%s1 + $0xd0] sm:$0xf]
    %v84 = vld [vmem:[%s1 + $0xd4] sm:$0xf]
    %v85 = vld [vmem:[%s1 + $0xd8] sm:$0xf]
    %v86 = vld [vmem:[%s1 + $0xdc] sm:$0xf]
    %v87 = vld [vmem:[%s1 + $0xe0] sm:$0xf]
    %v88 = vld [vmem:[%s1 + $0xe4] sm:$0xf]
    %v89 = vld [vmem:[%s1 + $0xe8] sm:$0xf]
    %v90 = vld [vmem:[%s1 + $0xec] sm:$0xf]
    %v91 = vld [vmem:[%s1 + $0xf0] sm:$0xf]
    %v92 = vld [vmem:[%s1 + $0xf4] sm:$0xf]
    %v93 = vld [vmem:[%s1 + $0xf8] sm:$0xf]
    %v94 = vld [vmem:[%s1 + $0xfc] sm:$0xf]
    %v95 = vld [vmem:[%s1 + $0x100] sm:$0xf]
    %v96 = vld [vmem:[%s1 + $0x104] sm:$0xf]
    %v97 = vld [vmem:[%s1 + $0x108] sm:$0xf]
    %v98 = vld [vmem:[%s1 + $0x10c] sm:$0xf]
    %v99 = vld [vmem:[%s1 + $0x110] sm:$0xf]
    %v100 = vld [vmem:[%s1 + $0x114] sm:$0xf]
    %v101 = vld [vmem:[%s1 + $0x118] sm:$0xf]
    %v102 = vld [vmem:[%s1 + $0x11c] sm:$0xf]
    %v103 = vld [vmem:[%s1 + $0x120] sm:$0xf]
    %v104 = vld [vmem:[%s1 + $0x124] sm:$0xf]
    %v105 = vld [vmem:[%s1 + $0x128] sm:$0xf]
    %v106 = vld [vmem:[%s1 + $0x12c] sm:$0xf]
    %v107 = vld [vmem:[%s1 + $0x130] sm:$0xf]
    %v108 = vld [vmem:[%s1 + $0x134] sm:$0xf]
    %v109 = vld [vmem:[%s1 + $0x138] sm:$0xf]
    %v110 = vld [vmem:[%s1 + $0x13c] sm:$0xf]
    %v111 = vld [vmem:[%s1 + $0x140] sm:$0xf]
    %v112 = vld [vmem:[%s1 + $0x144] sm:$0xf]
    %v113 = vld [vmem:[%s1 + $0x148] sm:$0xf]
    %v114 = vld [vmem:[%s1 + $0x14c] sm:$0xf]
    %v115 = vld [vmem:[%s1 + $0x150] sm:$0xf]
    %v116 = vld [vmem:[%s1 + $0x154] sm:$0xf]
    %v117 = vld [vmem:[%s1 + $0x158] sm:$0xf]
    %v118 = vld [vmem:[%s1 + $0x15c] sm:$0xf]
    %v119 = vld [vmem:[%s1 + $0x160] sm:$0xf]
    %v120 = vld [vmem:[%s1 + $0x164] sm:$0xf]
    %v121 = vld [vmem:[%s1 + $0x168] sm:$0xf]
    %v122 = vld [vmem:[%s1 + $0x16c] sm:$0xf]
    %v123 = vld [vmem:[%s1 + $0x170] sm:$0xf]
    %v124 = vld [vmem:[%s1 + $0x174] sm:$0xf]
    %v125 = vld [vmem:[%s1 + $0x178] sm:$0xf]
    %v126 = vld [vmem:[%s1 + $0x17c] sm:$0xf]
    %v133 = vunpack.c.l.b16 %v25
    %v134 = vunpack.c.h.b16 %v25
    %v135 = vunpack.c.l.b16 %v26
    %v136 = vunpack.c.h.b16 %v26
    %v137 = vunpack.c.l.b16 %v27
    %v138 = vunpack.c.h.b16 %v27
    %v139 = vunpack.c.l.b16 %v28
    %v140 = vunpack.c.h.b16 %v28
    %v141 = vunpack.c.l.b16 %v29
    %v142 = vunpack.c.h.b16 %v29
    %v143 = vunpack.c.l.b16 %v30
    %v144 = vunpack.c.h.b16 %v30
    %v145 = vpack.c.b16 %v139, %v133
    %v146 = vpack.c.b16 %v140, %v134
    %v147 = vpack.c.b16 %v141, %v135
    %v148 = vpack.c.b16 %v142, %v136
    %v149 = vpack.c.b16 %v143, %v137
    %v150 = vpack.c.b16 %v144, %v138
    %v253 = vunpack.c.l.b16 %v31
    %v254 = vunpack.c.l.b16 %v32
    %v255 = vunpack.c.l.b16 %v33
    %v256 = vunpack.c.l.b16 %v34
    %v257 = vunpack.c.l.b16 %v35
    %v258 = vunpack.c.l.b16 %v36
    %v259 = vunpack.c.l.b16 %v37
    %v260 = vunpack.c.l.b16 %v38
    %v261 = vunpack.c.l.b16 %v39
    %v262 = vunpack.c.l.b16 %v40
    %v263 = vunpack.c.l.b16 %v41
    %v264 = vunpack.c.l.b16 %v42
    %v265 = vunpack.c.l.b16 %v43
    %v266 = vunpack.c.l.b16 %v44
    %v267 = vunpack.c.l.b16 %v45
    %v268 = vunpack.c.l.b16 %v46
    %v269 = vunpack.c.l.b16 %v47
    %v270 = vunpack.c.l.b16 %v48
    %v271 = vunpack.c.l.b16 %v49
    %v272 = vunpack.c.l.b16 %v50
    %v273 = vunpack.c.l.b16 %v51
    %v274 = vunpack.c.l.b16 %v52
    %v275 = vunpack.c.l.b16 %v53
    %v276 = vunpack.c.l.b16 %v54
    %v277 = vunpack.c.l.b16 %v55
    %v278 = vunpack.c.l.b16 %v56
    %v279 = vunpack.c.l.b16 %v57
    %v280 = vunpack.c.l.b16 %v58
    %v281 = vunpack.c.l.b16 %v59
    %v282 = vunpack.c.l.b16 %v60
    %v283 = vunpack.c.l.b16 %v61
    %v284 = vunpack.c.l.b16 %v62
    %v285 = vunpack.c.l.b16 %v63
    %v286 = vunpack.c.l.b16 %v64
    %v287 = vunpack.c.l.b16 %v65
    %v288 = vunpack.c.l.b16 %v66
    %v289 = vunpack.c.l.b16 %v67
    %v290 = vunpack.c.l.b16 %v68
    %v291 = vunpack.c.l.b16 %v69
    %v292 = vunpack.c.l.b16 %v70
    %v293 = vunpack.c.l.b16 %v71
    %v294 = vunpack.c.l.b16 %v72
    %v295 = vunpack.c.l.b16 %v73
    %v296 = vunpack.c.l.b16 %v74
    %v297 = vunpack.c.l.b16 %v75
    %v298 = vunpack.c.l.b16 %v76
    %v299 = vunpack.c.l.b16 %v77
    %v300 = vunpack.c.l.b16 %v78
    %v301 = vunpack.c.l.b16 %v79
    %v302 = vunpack.c.l.b16 %v80
    %v303 = vunpack.c.l.b16 %v81
    %v304 = vunpack.c.l.b16 %v82
    %v305 = vunpack.c.l.b16 %v83
    %v306 = vunpack.c.l.b16 %v84
    %v307 = vunpack.c.l.b16 %v85
    %v308 = vunpack.c.l.b16 %v86
    %v309 = vunpack.c.l.b16 %v87
    %v310 = vunpack.c.l.b16 %v88
    %v311 = vunpack.c.l.b16 %v89
    %v312 = vunpack.c.l.b16 %v90
    %v313 = vunpack.c.l.b16 %v91
    %v314 = vunpack.c.l.b16 %v92
    %v315 = vunpack.c.l.b16 %v93
    %v316 = vunpack.c.l.b16 %v94
    %v317 = vunpack.c.l.b16 %v95
    %v318 = vunpack.c.l.b16 %v96
    %v319 = vunpack.c.l.b16 %v97
    %v320 = vunpack.c.l.b16 %v98
    %v321 = vunpack.c.l.b16 %v99
    %v322 = vunpack.c.l.b16 %v100
    %v323 = vunpack.c.l.b16 %v101
    %v324 = vunpack.c.l.b16 %v102
    %v325 = vunpack.c.l.b16 %v103
    %v326 = vunpack.c.l.b16 %v104
    %v327 = vunpack.c.l.b16 %v105
    %v328 = vunpack.c.l.b16 %v106
    %v329 = vunpack.c.l.b16 %v107
    %v330 = vunpack.c.l.b16 %v108
    %v331 = vunpack.c.l.b16 %v109
    %v332 = vunpack.c.l.b16 %v110
    %v333 = vunpack.c.l.b16 %v111
    %v334 = vunpack.c.l.b16 %v112
    %v335 = vunpack.c.l.b16 %v113
    %v336 = vunpack.c.l.b16 %v114
    %v337 = vunpack.c.l.b16 %v115
    %v338 = vunpack.c.l.b16 %v116
    %v339 = vunpack.c.l.b16 %v117
    %v340 = vunpack.c.l.b16 %v118
    %v341 = vunpack.c.l.b16 %v119
    %v342 = vunpack.c.l.b16 %v120
    %v343 = vunpack.c.l.b16 %v121
    %v344 = vunpack.c.l.b16 %v122
    %v345 = vunpack.c.l.b16 %v123
    %v346 = vunpack.c.l.b16 %v124
    %v347 = vunpack.c.l.b16 %v125
    %v348 = vunpack.c.l.b16 %v126
    %v349 = vpack.c.b16 %v254, %v253
    %v350 = vpack.c.b16 %v256, %v255
    %v351 = vpack.c.b16 %v258, %v257
    %v352 = vpack.c.b16 %v260, %v259
    %v353 = vpack.c.b16 %v262, %v261
    %v354 = vpack.c.b16 %v264, %v263
    %v355 = vpack.c.b16 %v266, %v265
    %v356 = vpack.c.b16 %v268, %v267
    %v357 = vpack.c.b16 %v270, %v269
    %v358 = vpack.c.b16 %v272, %v271
    %v359 = vpack.c.b16 %v274, %v273
    %v360 = vpack.c.b16 %v276, %v275
    %v361 = vpack.c.b16 %v278, %v277
    %v362 = vpack.c.b16 %v280, %v279
    %v363 = vpack.c.b16 %v282, %v281
    %v364 = vpack.c.b16 %v284, %v283
    %v365 = vpack.c.b16 %v286, %v285
    %v366 = vpack.c.b16 %v288, %v287
    %v367 = vpack.c.b16 %v290, %v289
    %v368 = vpack.c.b16 %v292, %v291
    %v369 = vpack.c.b16 %v294, %v293
    %v370 = vpack.c.b16 %v296, %v295
    %v371 = vpack.c.b16 %v298, %v297
    %v372 = vpack.c.b16 %v300, %v299
    %v373 = vpack.c.b16 %v302, %v301
    %v374 = vpack.c.b16 %v304, %v303
    %v375 = vpack.c.b16 %v306, %v305
    %v376 = vpack.c.b16 %v308, %v307
    %v377 = vpack.c.b16 %v310, %v309
    %v378 = vpack.c.b16 %v312, %v311
    %v379 = vpack.c.b16 %v314, %v313
    %v380 = vpack.c.b16 %v316, %v315
    %v381 = vpack.c.b16 %v318, %v317
    %v382 = vpack.c.b16 %v320, %v319
    %v383 = vpack.c.b16 %v322, %v321
    %v384 = vpack.c.b16 %v324, %v323
    %v385 = vpack.c.b16 %v326, %v325
    %v386 = vpack.c.b16 %v328, %v327
    %v387 = vpack.c.b16 %v330, %v329
    %v388 = vpack.c.b16 %v332, %v331
    %v389 = vpack.c.b16 %v334, %v333
    %v390 = vpack.c.b16 %v336, %v335
    %v391 = vpack.c.b16 %v338, %v337
    %v392 = vpack.c.b16 %v340, %v339
    %v393 = vpack.c.b16 %v342, %v341
    %v394 = vpack.c.b16 %v344, %v343
    %v395 = vpack.c.b16 %v346, %v345
    %v396 = vpack.c.b16 %v348, %v347
    %445 = vmatpush.bf16.msra.mxu0 %v356
    %446 = vmatpush.bf16.msra.mxu0 %v355
    %447 = vmatpush.bf16.msra.mxu0 %v354
    %448 = vmatpush.bf16.msra.mxu0 %v353
    %449 = vmatpush.bf16.msra.mxu0 %v352
    %450 = vmatpush.bf16.msra.mxu0 %v351
    %451 = vmatpush.bf16.msra.mxu0 %v350
    %452 = vmatpush.bf16.msra.mxu0 %v349
    %453 = vmatmul.bf16.gmra.mxu0 %v145
    %v454 = vpop.f32.mrf.mxu0
    %v455 = vadd.f32 0.0, %v454
    %v456 = vpop.f32.mrf.mxu0
    %v457 = vadd.f32 0.0, %v456
    %458 = vdwg.mxu0
    %459 = vmatpush.bf16.msra.mxu0 %v364
    %460 = vmatpush.bf16.msra.mxu0 %v363
    %461 = vmatpush.bf16.msra.mxu0 %v362
    %462 = vmatpush.bf16.msra.mxu0 %v361
    %463 = vmatpush.bf16.msra.mxu0 %v360
    %464 = vmatpush.bf16.msra.mxu0 %v359
    %465 = vmatpush.bf16.msra.mxu0 %v358
    %466 = vmatpush.bf16.msra.mxu0 %v357
    %467 = vmatmul.bf16.gmra.mxu0 %v146
    %v468 = vpop.f32.mrf.mxu0
    %v469 = vadd.f32 %v455, %v468
    %v470 = vpop.f32.mrf.mxu0
    %v471 = vadd.f32 %v457, %v470
    %472 = vdwg.mxu0
    %473 = vmatpush.bf16.msra.mxu0 %v372
    %474 = vmatpush.bf16.msra.mxu0 %v371
    %475 = vmatpush.bf16.msra.mxu0 %v370
    %476 = vmatpush.bf16.msra.mxu0 %v369
    %477 = vmatpush.bf16.msra.mxu0 %v368
    %478 = vmatpush.bf16.msra.mxu0 %v367
    %479 = vmatpush.bf16.msra.mxu0 %v366
    %480 = vmatpush.bf16.msra.mxu0 %v365
    %481 = vmatmul.bf16.gmra.mxu0 %v147
    %v482 = vpop.f32.mrf.mxu0
    %v483 = vadd.f32 %v469, %v482
    %v484 = vpop.f32.mrf.mxu0
    %v485 = vadd.f32 %v471, %v484
    %486 = vdwg.mxu0
    %487 = vmatpush.bf16.msra.mxu0 %v380
    %488 = vmatpush.bf16.msra.mxu0 %v379
    %489 = vmatpush.bf16.msra.mxu0 %v378
    %490 = vmatpush.bf16.msra.mxu0 %v377
    %491 = vmatpush.bf16.msra.mxu0 %v376
    %492 = vmatpush.bf16.msra.mxu0 %v375
    %493 = vmatpush.bf16.msra.mxu0 %v374
    %494 = vmatpush.bf16.msra.mxu0 %v373
    %495 = vmatmul.bf16.gmra.mxu0 %v148
    %v496 = vpop.f32.mrf.mxu0
    %v497 = vadd.f32 %v483, %v496
    %v498 = vpop.f32.mrf.mxu0
    %v499 = vadd.f32 %v485, %v498
    %500 = vdwg.mxu0
    %501 = vmatpush.bf16.msra.mxu0 %v388
    %502 = vmatpush.bf16.msra.mxu0 %v387
    %503 = vmatpush.bf16.msra.mxu0 %v386
    %504 = vmatpush.bf16.msra.mxu0 %v385
    %505 = vmatpush.bf16.msra.mxu0 %v384
    %506 = vmatpush.bf16.msra.mxu0 %v383
    %507 = vmatpush.bf16.msra.mxu0 %v382
    %508 = vmatpush.bf16.msra.mxu0 %v381
    %509 = vmatmul.bf16.gmra.mxu0 %v149
    %v510 = vpop.f32.mrf.mxu0
    %v511 = vadd.f32 %v497, %v510
    %v512 = vpop.f32.mrf.mxu0
    %v513 = vadd.f32 %v499, %v512
    %514 = vdwg.mxu0
    %515 = vmatpush.bf16.msra.mxu0 %v396
    %516 = vmatpush.bf16.msra.mxu0 %v395
    %517 = vmatpush.bf16.msra.mxu0 %v394
    %518 = vmatpush.bf16.msra.mxu0 %v393
    %519 = vmatpush.bf16.msra.mxu0 %v392
    %520 = vmatpush.bf16.msra.mxu0 %v391
    %521 = vmatpush.bf16.msra.mxu0 %v390
    %522 = vmatpush.bf16.msra.mxu0 %v389
    %523 = vmatmul.bf16.gmra.mxu0 %v150
    %v524 = vpop.f32.mrf.mxu0
    %v525 = vadd.f32 %v511, %v524
    %v526 = vpop.f32.mrf.mxu0
    %v527 = vadd.f32 %v513, %v526
    %528 = vdwg.mxu0
    %v529 = vld [vmem:[#allocation2] sm:$0x3]
    %vm530 = vcmask 261120
    %v531 = vsel %vm530, %v525, 0.0
    %v532 = vrot.slane %v531, 4
    %v533 = vadd.f32 %v531, %v532
    %v534 = vrot.slane %v533, 2
    %v535 = vadd.f32 %v533, %v534
    %v536 = vrot.slane %v535, 1
    %v537 = vadd.f32 %v535, %v536
    %v538 = vsel %vm530, %v527, 0.0
    %v539 = vrot.slane %v538, 4
    %v540 = vadd.f32 %v538, %v539
    %v541 = vrot.slane %v540, 2
    %v542 = vadd.f32 %v540, %v541
    %v543 = vrot.slane %v542, 1
    %v544 = vadd.f32 %v542, %v543
    %vm547 = vcmask 1041409
    %v548 = vsel %vm547, %v544, %v537
    %v550 = vadd.f32 %v529, %v548
    %vm551 = vcmask 254976
    %552 = vst.msk [vmem:[#allocation2] sm:$0x3] %vm551, %v550
    // Predicated region
    $region22: #{tpu_custom_call.1} parent=1 // pred_check
      %p553 = pneg %p19
    $region23: #{tpu_custom_call.1} parent=1 // pred_check_branch
      %555 = sbr.rel (%p553) target = $region25
    $region24: #{tpu_custom_call.1} parent=1 // pred_region
      %v556 = vld [vmem:[#allocation2] sm:$0x3]
      %v557 = vmul.f32 %v556, 0.125
      %v558 = vld [vmem:[%s3] sm:$0x1]
      %v559 = vperm.slane %v558, 0
      %v560 = vadd.f32 %v557, %v559
      %v561 = vxor.u32 %v560, 2147483648
      %v562 = vmul.f32 %v561, 1.442695
      %v563 = vpow.pop %v562
      %v564 = vadd.f32 %v563, 1.0
      %v565 = vrcp.pop %v564
      %v566 = vmul.f32 %v564, %v565
      %v567 = vsub.f32 1.0, %v566
      %v568 = vmul.f32 %v565, %v567
      %v569 = vadd.f32 %v565, %v568
      %vm570 = vweird.f32 %v564
      %vm571 = vweird.f32 %v565
      %vm572 = vmor %vm570, %vm571
      %v573 = vsel %vm572, %v565, %v569
      %v574 = vand.u32 2147483647, %v564
      %vm575 = vcmp.eq.f32.partialorder %v574, 8.507059e+37
      %v576 = vand.u32 %v564, 2147483648
      %v577 = vor.u32 1.1754944e-38, %v576
      %v578 = vsel %vm575, %v577, %v573
      %v579 = vmul.f32 1.0, %v578
      %v580 = vmul.f32 %v560, %v579
      %v581 = vpack.c.bf16 %v580, %v580
      %v582 = vld [vmem:[%s2] sm:$0xf]
      %v583 = vld [vmem:[%s2 + $0x4] sm:$0xf]
      %v584 = vld [vmem:[%s2 + $0x8] sm:$0xf]
      %v585 = vld [vmem:[%s2 + $0xc] sm:$0xf]
      %v586 = vld [vmem:[%s3 + $0x8] sm:$0x1]
      %v587 = vperm.slane %v586, 0
      %v592 = vunpack.c.l.b16 %v582
      %v593 = vunpack.c.l.b16 %v583
      %v594 = vunpack.c.l.b16 %v584
      %v595 = vunpack.c.l.b16 %v585
      %v596 = vpack.c.b16 %v593, %v592
      %v597 = vpack.c.b16 %v595, %v594
      %v601 = vsel %vm530, %v581, 0
      %603 = vmatpush.bf16.msra.mxu0 0
      %604 = vmatpush.bf16.msra.mxu0 0
      %605 = vmatpush.bf16.msra.mxu0 0
      %606 = vmatpush.bf16.msra.mxu0 0
      %607 = vmatpush.bf16.msra.mxu0 0
      %608 = vmatpush.bf16.msra.mxu0 0
      %609 = vmatpush.bf16.msra.mxu0 %v597
      %610 = vmatpush.bf16.msra.mxu0 %v596
      %611 = vmatmul.bf16.gmra.mxu0 %v601
      %v612 = vpop.f32.mrf.mxu0
      %v613 = vadd.f32 %v587, %v612
      %v614 = vpop.f32.mrf.mxu0
      %615 = vdwg.mxu0
      %vm616 = vcmask 9216
      %617 = vst.msk [vmem:[#allocation3] sm:$0x3] %vm616, %v613
    $region25: #{tpu_custom_call.1} parent=1 // pred_fallthru
      _
    // Predicated region
    $region26: #{tpu_custom_call.1} parent=1 // pred_check
      _
    $region27: #{tpu_custom_call.1} parent=1 // pred_check_branch
      %619 = sbr.rel (0) target = $region29
    $region28: #{tpu_custom_call.1} parent=1 // pred_region
      %621 = vsyncadd [#allocation4], 0
      %s623 = sshll.u32 [#allocation3], 4
      %s624 = int_to_ptr.vmem [resolvable:$true] %s623
      %s625 = sshll.u32 %s4, 4
      %s626 = int_to_ptr.hbm [resolvable:$true] %s625
      %628 = dma.vmem_to_hbm [thread:$0]  %s624, 32, %s626, [#allocation4]
    $region29: #{tpu_custom_call.1} parent=1 // pred_fallthru
      _
    // Predicated region
    $region30: #{tpu_custom_call.1} parent=1 // pred_check
      _
    $region31: #{tpu_custom_call.1} parent=1 // pred_check_branch
      %630 = sbr.rel (0) target = $region33
    $region32: #{tpu_custom_call.1} parent=1 // pred_region
      %632 = dma.done [#allocation4], 32
    $region33: #{tpu_custom_call.1} parent=1 // pred_fallthru
      _
    %633 = vsyncpa [#allocation4], 1

</llo_original>
